<compile_context>
chip_gen: v7x
topology: tpu7x:2x2x1
jax: 0.10.0
libtpu: 0.0.40
codegen_flags: <defaults>
</compile_context>

<pallas_src>
import jax
import jax.numpy as jnp
from jax import lax
from jax.experimental import pallas as pl
from jax.experimental.pallas import tpu as pltpu


def conv_pool_kernel(xcol_ref, w_ref, b_ref, alpha_ref, out_ref):
    """One Conv3d(k=3,p=1) + PReLU + MaxPool3d(2,2) block, whole batch at once.

    xcol_ref : (8*G, Kp)  bf16  im2col patches, pool-window-major row groups
                                (G = sublane-padded N*cells, Kp = lane-padded 27*Cin)
    w_ref    : (Kp, Cout) bf16  conv weights as a matmul matrix (zero-padded K)
    b_ref    : (1, Cout)  f32   bias
    alpha_ref: (1, 1)     f32   PReLU slope (SMEM scalar)
    out_ref  : (M, Cout)  f32   pooled output rows, M = N * Dp*Hp*Wp
    """
    M, _ = out_ref.shape
    G = xcol_ref.shape[0] // 8

    # Conv3d for all 8 pool-window shifts and the whole batch as ONE MXU matmul
    # (bf16 operands, f32 accumulation).
    y = jnp.dot(xcol_ref[...], w_ref[...], preferred_element_type=jnp.float32)

    # MaxPool3d(2, 2): fold the 8 pool-window row groups with 7 elementwise
    # maxima.  G is a multiple of 8, so every slice is sublane-aligned.
    m = y[0:G, :]
    for l in range(1, 8):
        m = jnp.maximum(m, y[l * G:(l + 1) * G, :])
    if M != G:                          # drop sublane-padding rows (static, offset 0)
        m = m[0:M, :]

    # Bias + PReLU hoisted after the pool fold: bias is constant across the
    # window and PReLU is monotone for slope >= 0 (PyTorch init 0.25).
    m = m + b_ref[...]
    a = alpha_ref[0, 0]
    out_ref[...] = jnp.where(m >= 0.0, m, a * m)


def conv_block(x_ndhwc, w_oidhw, bias, alpha):
    """Apply one Conv3d(k=3,p=1) + PReLU + MaxPool3d(2,2) block. x: (N,D,H,W,Cin)."""
    N, D, H, W, Cin = x_ndhwc.shape
    Cout = w_oidhw.shape[0]
    assert D % 2 == 0 and H % 2 == 0 and W % 2 == 0, "MaxPool3d(2,2) expects even spatial dims"
    Dp, Hp, Wp = D // 2, H // 2, W // 2
    cells = Dp * Hp * Wp
    M = N * cells                               # pooled output rows (whole batch)
    G = ((M + 7) // 8) * 8                      # sublane-aligned row group per pool shift
    K = 27 * Cin
    Kp = ((K + 127) // 128) * 128               # lane-aligned contraction length

    # --- JAX glue: im2col in pool-window-major order (pure data rearrangement) ---
    xp = jnp.pad(x_ndhwc, ((0, 0), (1, 1), (1, 1), (1, 1), (0, 0)))
    patches = [xp[:, kd:kd + D, kh:kh + H, kw:kw + W, :]
               for kd in range(3) for kh in range(3) for kw in range(3)]
    xcol = jnp.concatenate(patches, axis=-1)                   # (N, D, H, W, K)
    xcol = xcol.reshape(N, Dp, 2, Hp, 2, Wp, 2, K)
    xcol = xcol.transpose(2, 4, 6, 0, 1, 3, 5, 7)              # (2,2,2, N, Dp,Hp,Wp, K)
    xcol = xcol.reshape(8, M, K)
    xcol = jnp.pad(xcol, ((0, 0), (0, G - M), (0, Kp - K)))    # zero rows/cols are free
    xcol = xcol.reshape(8 * G, Kp).astype(jnp.bfloat16)        # bf16 MXU operand

    # Weight (Cout, Cin, 3, 3, 3) -> (kd, kh, kw, Cin, Cout) -> (27*Cin, Cout),
    # matching the patch feature ordering above; zero-pad K to Kp.
    w2 = jnp.transpose(w_oidhw, (2, 3, 4, 1, 0)).reshape(K, Cout)
    w2 = jnp.pad(w2, ((0, Kp - K), (0, 0))).astype(jnp.bfloat16)
    b2 = bias.reshape(1, Cout).astype(jnp.float32)
    a2 = jnp.asarray(alpha, jnp.float32).reshape(1, 1)

    out = pl.pallas_call(
        conv_pool_kernel,
        out_shape=jax.ShapeDtypeStruct((M, Cout), jnp.float32),
        grid_spec=pltpu.PrefetchScalarGridSpec(
            num_scalar_prefetch=0,
            grid=(1,),
            in_specs=[
                pl.BlockSpec((8 * G, Kp), lambda i: (0, 0)),
                pl.BlockSpec((Kp, Cout), lambda i: (0, 0)),
                pl.BlockSpec((1, Cout), lambda i: (0, 0)),
                pl.BlockSpec(memory_space=pltpu.MemorySpace.SMEM),  # PReLU slope
            ],
            out_specs=pl.BlockSpec((M, Cout), lambda i: (0, 0)),
        ),
        compiler_params=pltpu.CompilerParams(
            dimension_semantics=("arbitrary",)),
    )(xcol, w2, b2, a2)

    return out.reshape(N, Dp, Hp, Wp, Cout)                    # free XLA reshape


def feature_encoder_forward(x_ncdhw, params, n_features):
    """Pallas implementation of FeatureEncoder.forward.  x_ncdhw: (N, C, D, H, W)."""
    x = jnp.transpose(x_ncdhw, (0, 2, 3, 4, 1))                # NCDHW -> NDHWC
    for (w, b, alpha) in params:
        x = conv_block(x, w, b, alpha)
    x = jnp.transpose(x, (0, 4, 1, 2, 3))                      # back to NCDHW
    return x.reshape(-1, n_features)                           # == torch .view(-1, n_features)


def feature_encoder_reference(x_ncdhw, params, n_features):
    """Pure-JAX f32 reference (lax.conv + reduce_window), mirrors the PyTorch module."""
    x = jnp.transpose(x_ncdhw, (0, 2, 3, 4, 1))
    for (w, b, alpha) in params:
        wd = jnp.transpose(w, (2, 3, 4, 1, 0))                 # DHWIO
        y = lax.conv_general_dilated(
            x, wd, window_strides=(1, 1, 1), padding="SAME",
            dimension_numbers=("NDHWC", "DHWIO", "NDHWC"))
        y = y + b
        y = jnp.where(y >= 0.0, y, alpha * y)
        y = lax.reduce_window(y, -jnp.inf, lax.max,
                              (1, 2, 2, 2, 1), (1, 2, 2, 2, 1), "VALID")
        x = y
    return jnp.transpose(x, (0, 4, 1, 2, 3)).reshape(-1, n_features)


if __name__ == "__main__":
    # Small shapes consistent with the module: batch=2, in_channels=4,
    # spatial 8x8x8 -> after three 2x pools -> 1x1x1 with 32 channels.
    N, Cin, D, H, W = 2, 4, 8, 8, 8
    n_features = 32 * (D // 8) * (H // 8) * (W // 8)           # = 32

    key = jax.random.PRNGKey(0)
    kx, k0, k1, k2, kb0, kb1, kb2 = jax.random.split(key, 7)
    x = jax.random.normal(kx, (N, Cin, D, H, W), jnp.float32)

    # Deterministic synthetic parameters (torch shapes: conv w (Cout,Cin,3,3,3),
    # bias (Cout,), PReLU single shared slope a=0.25 — PyTorch default init).
    def make_block_params(kw, kb, cin, cout):
        w = 0.1 * jax.random.normal(kw, (cout, cin, 3, 3, 3), jnp.float32)
        b = 0.01 * jax.random.normal(kb, (cout,), jnp.float32)
        return (w, b, jnp.float32(0.25))

    params = [
        make_block_params(k0, kb0, Cin, 8),
        make_block_params(k1, kb1, 8, 16),
        make_block_params(k2, kb2, 16, 32),
    ]

    out = feature_encoder_forward(x, params, n_features)
    out = jax.block_until_ready(out)
    assert out.shape == (N, n_features), out.shape

    ref = feature_encoder_reference(x, params, n_features)
    # Matmul operands are bf16 (f32 accumulation), hence the loosened tolerance.
    if not bool(jnp.allclose(out, ref, rtol=1e-2, atol=1e-1)):
        raise AssertionError("Pallas FeatureEncoder does not match reference")

    print("KERNEL_OK")
</pallas_src>

<mosaic_0001>
module attributes {stable_mosaic.version = 11 : i64} {
  func.func @conv_pool_kernel(%arg0: i32, %arg1: memref<1024x128xbf16, #tpu.memory_space<vmem>>, %arg2: memref<128x8xbf16, #tpu.memory_space<vmem>>, %arg3: memref<1x8xf32, #tpu.memory_space<vmem>>, %arg4: memref<1x1xf32, #tpu.memory_space<smem>>, %arg5: memref<128x8xf32, #tpu.memory_space<vmem>>) attributes {dimension_semantics = [#tpu.dimension_semantics<arbitrary>], iteration_bounds = array<i64: 1>, scalar_prefetch = 0 : i64, scratch_operands = 0 : i64, tpu.core_type = #tpu.core_type<tc>, window_params = [{pipeline_mode = #tpu.pipeline_mode<synchronous>, transform_indices = @transform_0, window_bounds = array<i64: 1024, 128>}, {pipeline_mode = #tpu.pipeline_mode<synchronous>, transform_indices = @transform_1, window_bounds = array<i64: 128, 8>}, {pipeline_mode = #tpu.pipeline_mode<synchronous>, transform_indices = @transform_2, window_bounds = array<i64: 1, 8>}, {transform_indices = @transform_3, window_bounds = array<i64: 1, 1>}, {pipeline_mode = #tpu.pipeline_mode<synchronous>, transform_indices = @transform_4, window_bounds = array<i64: 128, 8>}]} {
    %c0 = arith.constant 0 : index
    %c0_0 = arith.constant 0 : index
    %0 = vector.load %arg1[%c0, %c0_0] : memref<1024x128xbf16, #tpu.memory_space<vmem>>, vector<1024x128xbf16>
    %c0_1 = arith.constant 0 : index
    %c0_2 = arith.constant 0 : index
    %1 = vector.load %arg2[%c0_1, %c0_2] : memref<128x8xbf16, #tpu.memory_space<vmem>>, vector<128x8xbf16>
    %cst = arith.constant dense<0.000000e+00> : vector<1024x8xf32>
    %2 = tpu.matmul %0, %1, %cst {dimension_numbers = #tpu.dot_dimension_numbers<[1], [0], [0], [1], [0, 0, 1, 1], [], []>} : vector<1024x128xbf16>, vector<128x8xbf16>, vector<1024x8xf32> -> vector<1024x8xf32>
    %3 = vector.extract_strided_slice %2 {offsets = [0, 0], sizes = [128, 8], strides = [1, 1]} : vector<1024x8xf32> to vector<128x8xf32>
    %4 = vector.extract_strided_slice %2 {offsets = [128, 0], sizes = [128, 8], strides = [1, 1]} : vector<1024x8xf32> to vector<128x8xf32>
    %5 = arith.maximumf %3, %4 : vector<128x8xf32>
    %6 = vector.extract_strided_slice %2 {offsets = [256, 0], sizes = [128, 8], strides = [1, 1]} : vector<1024x8xf32> to vector<128x8xf32>
    %7 = arith.maximumf %5, %6 : vector<128x8xf32>
    %8 = vector.extract_strided_slice %2 {offsets = [384, 0], sizes = [128, 8], strides = [1, 1]} : vector<1024x8xf32> to vector<128x8xf32>
    %9 = arith.maximumf %7, %8 : vector<128x8xf32>
    %10 = vector.extract_strided_slice %2 {offsets = [512, 0], sizes = [128, 8], strides = [1, 1]} : vector<1024x8xf32> to vector<128x8xf32>
    %11 = arith.maximumf %9, %10 : vector<128x8xf32>
    %12 = vector.extract_strided_slice %2 {offsets = [640, 0], sizes = [128, 8], strides = [1, 1]} : vector<1024x8xf32> to vector<128x8xf32>
    %13 = arith.maximumf %11, %12 : vector<128x8xf32>
    %14 = vector.extract_strided_slice %2 {offsets = [768, 0], sizes = [128, 8], strides = [1, 1]} : vector<1024x8xf32> to vector<128x8xf32>
    %15 = arith.maximumf %13, %14 : vector<128x8xf32>
    %16 = vector.extract_strided_slice %2 {offsets = [896, 0], sizes = [128, 8], strides = [1, 1]} : vector<1024x8xf32> to vector<128x8xf32>
    %17 = arith.maximumf %15, %16 : vector<128x8xf32>
    %c0_3 = arith.constant 0 : index
    %c0_4 = arith.constant 0 : index
    %18 = vector.load %arg3[%c0_3, %c0_4] : memref<1x8xf32, #tpu.memory_space<vmem>>, vector<1x8xf32>
    %19 = vector.broadcast %18 : vector<1x8xf32> to vector<128x8xf32>
    %20 = arith.addf %17, %19 : vector<128x8xf32>
    %c0_5 = arith.constant 0 : index
    %c0_6 = arith.constant 0 : index
    %21 = memref.load %arg4[%c0_5, %c0_6] : memref<1x1xf32, #tpu.memory_space<smem>>
    %cst_7 = arith.constant 0.000000e+00 : f32
    %22 = vector.broadcast %cst_7 : f32 to vector<128x8xf32>
    %23 = arith.cmpf oge, %20, %22 : vector<128x8xf32>
    %24 = vector.broadcast %21 : f32 to vector<128x8xf32>
    %25 = arith.mulf %24, %20 : vector<128x8xf32>
    %26 = arith.select %23, %20, %25 : vector<128x8xi1>, vector<128x8xf32>
    %c0_8 = arith.constant 0 : index
    %c0_9 = arith.constant 0 : index
    %27 = vector.load %arg5[%c0_8, %c0_9] : memref<128x8xf32, #tpu.memory_space<vmem>>, vector<128x8xf32>
    tpu.vector_store %arg5[%c0_8, %c0_9], %26 {strides = array<i32>} : memref<128x8xf32, #tpu.memory_space<vmem>>, vector<128x8xf32>,
    return
  }
  func.func @transform_0(%arg0: i32) -> (i32, i32) {
    %c0_i32 = arith.constant 0 : i32
    %c0_i32_0 = arith.constant 0 : i32
    %c0_i32_1 = arith.constant 0 : i32
    return %c0_i32, %c0_i32_0 : i32, i32
  }
  func.func @transform_1(%arg0: i32) -> (i32, i32) {
    %c0_i32 = arith.constant 0 : i32
    %c0_i32_0 = arith.constant 0 : i32
    %c0_i32_1 = arith.constant 0 : i32
    return %c0_i32, %c0_i32_0 : i32, i32
  }
  func.func @transform_2(%arg0: i32) -> (i32, i32) {
    %c0_i32 = arith.constant 0 : i32
    %c0_i32_0 = arith.constant 0 : i32
    %c0_i32_1 = arith.constant 0 : i32
    return %c0_i32, %c0_i32_0 : i32, i32
  }
  func.func @transform_3(%arg0: i32) -> (i32, i32) {
    %c0_i32 = arith.constant 0 : i32
    %c0_i32_0 = arith.constant 0 : i32
    %c0_i32_1 = arith.constant 0 : i32
    return %c0_i32, %c0_i32_0 : i32, i32
  }
  func.func @transform_4(%arg0: i32) -> (i32, i32) {
    %c0_i32 = arith.constant 0 : i32
    %c0_i32_0 = arith.constant 0 : i32
    %c0_i32_1 = arith.constant 0 : i32
    return %c0_i32, %c0_i32_0 : i32, i32
  }
}

</mosaic_0001>

<llo_original>
// kernel: tpu_custom_call.1
$region0: #{tpu_custom_call.1}
  #allocation0 [shape = 'u32[]', space=smem, size = 0x4, offset = 0x4, fixed_abs, tag = 'smem constant byte address 0x4 - core index']
  #allocation1 [shape = 'u32[144,128]{1,0:T(1,128)}', space=vmem, size = 0x12000, scoped, tag = 'internal scratch']
  #allocation2 [shape = 'f32[1,1]{1,0:T(1,128)S(6)}', space=smem, size = 0x200, scoped, tag = 'scoped memory for tpu_custom_call.1']
  %s0 = inlined_call_operand.hbm [shape: bf16[1024,128], index: 0, kind: input, shape index: {}]
  %s1 = inlined_call_operand.vmem [shape: bf16[128,8], index: 1, kind: input, shape index: {}]
  %s2 = inlined_call_operand.vmem [shape: f32[1,8], index: 2, kind: input, shape index: {}]
  %s3 = inlined_call_operand.<no memory space> [shape: f32[1,1], index: 3, kind: input, shape index: {}]
  %s4 = inlined_call_operand.vmem [shape: f32[128,8], index: 4, kind: output, shape index: {}]
  %s5 = sld [smem:[#allocation0]]
  $region30: #{tpu_custom_call.1} parent=0
    _
  %s7 = ssub.s32 1, %s5
  %s8 = scalar_select 0, %s7, %s5
  %9 = sst [smem:[#allocation2]] %s3
  $region1: #{tpu_custom_call.1} parent=0
    #allocation3 [shape = 'u8[262144]{0}', space=vmem, size = 0x40000, scoped, tag = 'input window, operand 0, single buffered']
    #allocation4 [shape = 's32[1]{0}', space=sflag, size = 0x4, scoped, tag = 'scoped memory for tpu_custom_call.1']
    %10 = vsyncpa [#allocation4], 0
    // Predicated region
    $region2: #{tpu_custom_call.1} parent=1 // pred_check
      _
    $region3: #{tpu_custom_call.1} parent=1 // pred_check_branch
      %12 = sbr.rel (0) target = $region5
    $region4: #{tpu_custom_call.1} parent=1 // pred_region
      %s14 = ssub.s32 8192, 8192
      %15 = vsyncadd [#allocation4], %s14
      %s16 = sshll.u32 [#allocation3], 4
      %s17 = int_to_ptr.vmem [resolvable:$true] %s16
      %22 = dma.hbm_to_vmem [thread:$0]  %s0, 8192, %s17, [#allocation4], 64, 64, 4
    $region5: #{tpu_custom_call.1} parent=1 // pred_fallthru
      _
    // Predicated region
    $region6: #{tpu_custom_call.1} parent=1 // pred_check
      _
    $region7: #{tpu_custom_call.1} parent=1 // pred_check_branch
      %24 = sbr.rel (0) target = $region9
    $region8: #{tpu_custom_call.1} parent=1 // pred_region
      _
    $region9: #{tpu_custom_call.1} parent=1 // pred_fallthru
      _
    // Predicated region
    $region10: #{tpu_custom_call.1} parent=1 // pred_check
      _
    $region11: #{tpu_custom_call.1} parent=1 // pred_check_branch
      %26 = sbr.rel (0) target = $region13
    $region12: #{tpu_custom_call.1} parent=1 // pred_region
      _
    $region13: #{tpu_custom_call.1} parent=1 // pred_fallthru
      _
    // Predicated region
    $region14: #{tpu_custom_call.1} parent=1 // pred_check
      _
    $region15: #{tpu_custom_call.1} parent=1 // pred_check_branch
      %28 = sbr.rel (0) target = $region17
    $region16: #{tpu_custom_call.1} parent=1 // pred_region
      _
    $region17: #{tpu_custom_call.1} parent=1 // pred_fallthru
      _
    // Predicated region
    $region18: #{tpu_custom_call.1} parent=1 // pred_check
      _
    $region19: #{tpu_custom_call.1} parent=1 // pred_check_branch
      %30 = sbr.rel (0) target = $region21
    $region20: #{tpu_custom_call.1} parent=1 // pred_region
      %31 = dma.done [#allocation4], 8192
    $region21: #{tpu_custom_call.1} parent=1 // pred_fallthru
      _
    %v33 = vld [vmem:[#allocation3] sm:$0xf]
    %v34 = vld [vmem:[#allocation3 + $0x4] sm:$0xf]
    %v35 = vld [vmem:[#allocation3 + $0x8] sm:$0xf]
    %v36 = vld [vmem:[#allocation3 + $0xc] sm:$0xf]
    %v37 = vld [vmem:[#allocation3 + $0x10] sm:$0xf]
    %v38 = vld [vmem:[#allocation3 + $0x14] sm:$0xf]
    %v39 = vld [vmem:[#allocation3 + $0x18] sm:$0xf]
    %v40 = vld [vmem:[#allocation3 + $0x1c] sm:$0xf]
    %v41 = vld [vmem:[#allocation3 + $0x20] sm:$0xf]
    %v42 = vld [vmem:[#allocation3 + $0x24] sm:$0xf]
    %v43 = vld [vmem:[#allocation3 + $0x28] sm:$0xf]
    %v44 = vld [vmem:[#allocation3 + $0x2c] sm:$0xf]
    %v45 = vld [vmem:[#allocation3 + $0x30] sm:$0xf]
    %v46 = vld [vmem:[#allocation3 + $0x34] sm:$0xf]
    %v47 = vld [vmem:[#allocation3 + $0x38] sm:$0xf]
    %v48 = vld [vmem:[#allocation3 + $0x3c] sm:$0xf]
    %v49 = vld [vmem:[#allocation3 + $0x40] sm:$0xf]
    %v50 = vld [vmem:[#allocation3 + $0x44] sm:$0xf]
    %v51 = vld [vmem:[#allocation3 + $0x48] sm:$0xf]
    %v52 = vld [vmem:[#allocation3 + $0x4c] sm:$0xf]
    %v53 = vld [vmem:[#allocation3 + $0x50] sm:$0xf]
    %v54 = vld [vmem:[#allocation3 + $0x54] sm:$0xf]
    %v55 = vld [vmem:[#allocation3 + $0x58] sm:$0xf]
    %v56 = vld [vmem:[#allocation3 + $0x5c] sm:$0xf]
    %v57 = vld [vmem:[#allocation3 + $0x60] sm:$0xf]
    %v58 = vld [vmem:[#allocation3 + $0x64] sm:$0xf]
    %v59 = vld [vmem:[#allocation3 + $0x68] sm:$0xf]
    %v60 = vld [vmem:[#allocation3 + $0x6c] sm:$0xf]
    %v61 = vld [vmem:[#allocation3 + $0x70] sm:$0xf]
    %v62 = vld [vmem:[#allocation3 + $0x74] sm:$0xf]
    %v63 = vld [vmem:[#allocation3 + $0x78] sm:$0xf]
    %v64 = vld [vmem:[#allocation3 + $0x7c] sm:$0xf]
    %v65 = vld [vmem:[#allocation3 + $0x80] sm:$0xf]
    %v66 = vld [vmem:[#allocation3 + $0x84] sm:$0xf]
    %v67 = vld [vmem:[#allocation3 + $0x88] sm:$0xf]
    %v68 = vld [vmem:[#allocation3 + $0x8c] sm:$0xf]
    %v69 = vld [vmem:[#allocation3 + $0x90] sm:$0xf]
    %v70 = vld [vmem:[#allocation3 + $0x94] sm:$0xf]
    %v71 = vld [vmem:[#allocation3 + $0x98] sm:$0xf]
    %v72 = vld [vmem:[#allocation3 + $0x9c] sm:$0xf]
    %v73 = vld [vmem:[#allocation3 + $0xa0] sm:$0xf]
    %v74 = vld [vmem:[#allocation3 + $0xa4] sm:$0xf]
    %v75 = vld [vmem:[#allocation3 + $0xa8] sm:$0xf]
    %v76 = vld [vmem:[#allocation3 + $0xac] sm:$0xf]
    %v77 = vld [vmem:[#allocation3 + $0xb0] sm:$0xf]
    %v78 = vld [vmem:[#allocation3 + $0xb4] sm:$0xf]
    %v79 = vld [vmem:[#allocation3 + $0xb8] sm:$0xf]
    %v80 = vld [vmem:[#allocation3 + $0xbc] sm:$0xf]
    %v81 = vld [vmem:[#allocation3 + $0xc0] sm:$0xf]
    %v82 = vld [vmem:[#allocation3 + $0xc4] sm:$0xf]
    %v83 = vld [vmem:[#allocation3 + $0xc8] sm:$0xf]
    %v84 = vld [vmem:[#allocation3 + $0xcc] sm:$0xf]
    %v85 = vld [vmem:[#allocation3 + $0xd0] sm:$0xf]
    %v86 = vld [vmem:[#allocation3 + $0xd4] sm:$0xf]
    %v87 = vld [vmem:[#allocation3 + $0xd8] sm:$0xf]
    %v88 = vld [vmem:[#allocation3 + $0xdc] sm:$0xf]
    %v89 = vld [vmem:[#allocation3 + $0xe0] sm:$0xf]
    %v90 = vld [vmem:[#allocation3 + $0xe4] sm:$0xf]
    %v91 = vld [vmem:[#allocation3 + $0xe8] sm:$0xf]
    %v92 = vld [vmem:[#allocation3 + $0xec] sm:$0xf]
    %v93 = vld [vmem:[#allocation3 + $0xf0] sm:$0xf]
    %v94 = vld [vmem:[#allocation3 + $0xf4] sm:$0xf]
    %v95 = vld [vmem:[#allocation3 + $0xf8] sm:$0xf]
    %v96 = vld [vmem:[#allocation3 + $0xfc] sm:$0xf]
    %v97 = vld [vmem:[#allocation3 + $0x100] sm:$0xf]
    %v98 = vld [vmem:[#allocation3 + $0x104] sm:$0xf]
    %v99 = vld [vmem:[#allocation3 + $0x108] sm:$0xf]
    %v100 = vld [vmem:[#allocation3 + $0x10c] sm:$0xf]
    %v101 = vld [vmem:[#allocation3 + $0x110] sm:$0xf]
    %v102 = vld [vmem:[#allocation3 + $0x114] sm:$0xf]
    %v103 = vld [vmem:[#allocation3 + $0x118] sm:$0xf]
    %v104 = vld [vmem:[#allocation3 + $0x11c] sm:$0xf]
    %v105 = vld [vmem:[#allocation3 + $0x120] sm:$0xf]
    %v106 = vld [vmem:[#allocation3 + $0x124] sm:$0xf]
    %v107 = vld [vmem:[#allocation3 + $0x128] sm:$0xf]
    %v108 = vld [vmem:[#allocation3 + $0x12c] sm:$0xf]
    %v109 = vld [vmem:[#allocation3 + $0x130] sm:$0xf]
    %v110 = vld [vmem:[#allocation3 + $0x134] sm:$0xf]
    %v111 = vld [vmem:[#allocation3 + $0x138] sm:$0xf]
    %v112 = vld [vmem:[#allocation3 + $0x13c] sm:$0xf]
    %v113 = vld [vmem:[#allocation3 + $0x140] sm:$0xf]
    %v114 = vld [vmem:[#allocation3 + $0x144] sm:$0xf]
    %v115 = vld [vmem:[#allocation3 + $0x148] sm:$0xf]
    %v116 = vld [vmem:[#allocation3 + $0x14c] sm:$0xf]
    %v117 = vld [vmem:[#allocation3 + $0x150] sm:$0xf]
    %v118 = vld [vmem:[#allocation3 + $0x154] sm:$0xf]
    %v119 = vld [vmem:[#allocation3 + $0x158] sm:$0xf]
    %v120 = vld [vmem:[#allocation3 + $0x15c] sm:$0xf]
    %v121 = vld [vmem:[#allocation3 + $0x160] sm:$0xf]
    %v122 = vld [vmem:[#allocation3 + $0x164] sm:$0xf]
    %v123 = vld [vmem:[#allocation3 + $0x168] sm:$0xf]
    %v124 = vld [vmem:[#allocation3 + $0x16c] sm:$0xf]
    %v125 = vld [vmem:[#allocation3 + $0x170] sm:$0xf]
    %v126 = vld [vmem:[#allocation3 + $0x174] sm:$0xf]
    %v127 = vld [vmem:[#allocation3 + $0x178] sm:$0xf]
    %v128 = vld [vmem:[#allocation3 + $0x17c] sm:$0xf]
    %v129 = vld [vmem:[#allocation3 + $0x180] sm:$0xf]
    %v130 = vld [vmem:[#allocation3 + $0x184] sm:$0xf]
    %v131 = vld [vmem:[#allocation3 + $0x188] sm:$0xf]
    %v132 = vld [vmem:[#allocation3 + $0x18c] sm:$0xf]
    %v133 = vld [vmem:[#allocation3 + $0x190] sm:$0xf]
    %v134 = vld [vmem:[#allocation3 + $0x194] sm:$0xf]
    %v135 = vld [vmem:[#allocation3 + $0x198] sm:$0xf]
    %v136 = vld [vmem:[#allocation3 + $0x19c] sm:$0xf]
    %v137 = vld [vmem:[#allocation3 + $0x1a0] sm:$0xf]
    %v138 = vld [vmem:[#allocation3 + $0x1a4] sm:$0xf]
    %v139 = vld [vmem:[#allocation3 + $0x1a8] sm:$0xf]
    %v140 = vld [vmem:[#allocation3 + $0x1ac] sm:$0xf]
    %v141 = vld [vmem:[#allocation3 + $0x1b0] sm:$0xf]
    %v142 = vld [vmem:[#allocation3 + $0x1b4] sm:$0xf]
    %v143 = vld [vmem:[#allocation3 + $0x1b8] sm:$0xf]
    %v144 = vld [vmem:[#allocation3 + $0x1bc] sm:$0xf]
    %v145 = vld [vmem:[#allocation3 + $0x1c0] sm:$0xf]
    %v146 = vld [vmem:[#allocation3 + $0x1c4] sm:$0xf]
    %v147 = vld [vmem:[#allocation3 + $0x1c8] sm:$0xf]
    %v148 = vld [vmem:[#allocation3 + $0x1cc] sm:$0xf]
    %v149 = vld [vmem:[#allocation3 + $0x1d0] sm:$0xf]
    %v150 = vld [vmem:[#allocation3 + $0x1d4] sm:$0xf]
    %v151 = vld [vmem:[#allocation3 + $0x1d8] sm:$0xf]
    %v152 = vld [vmem:[#allocation3 + $0x1dc] sm:$0xf]
    %v153 = vld [vmem:[#allocation3 + $0x1e0] sm:$0xf]
    %v154 = vld [vmem:[#allocation3 + $0x1e4] sm:$0xf]
    %v155 = vld [vmem:[#allocation3 + $0x1e8] sm:$0xf]
    %v156 = vld [vmem:[#allocation3 + $0x1ec] sm:$0xf]
    %v157 = vld [vmem:[#allocation3 + $0x1f0] sm:$0xf]
    %v158 = vld [vmem:[#allocation3 + $0x1f4] sm:$0xf]
    %v159 = vld [vmem:[#allocation3 + $0x1f8] sm:$0xf]
    %v160 = vld [vmem:[#allocation3 + $0x1fc] sm:$0xf]
    %v161 = vld [vmem:[%s1] sm:$0xf]
    %v162 = vld [vmem:[%s1 + $0x4] sm:$0xf]
    %v163 = vld [vmem:[%s1 + $0x8] sm:$0xf]
    %v164 = vld [vmem:[%s1 + $0xc] sm:$0xf]
    %v165 = vld [vmem:[%s1 + $0x10] sm:$0xf]
    %v166 = vld [vmem:[%s1 + $0x14] sm:$0xf]
    %v167 = vld [vmem:[%s1 + $0x18] sm:$0xf]
    %v168 = vld [vmem:[%s1 + $0x1c] sm:$0xf]
    %v169 = vld [vmem:[%s1 + $0x20] sm:$0xf]
    %v170 = vld [vmem:[%s1 + $0x24] sm:$0xf]
    %v171 = vld [vmem:[%s1 + $0x28] sm:$0xf]
    %v172 = vld [vmem:[%s1 + $0x2c] sm:$0xf]
    %v173 = vld [vmem:[%s1 + $0x30] sm:$0xf]
    %v174 = vld [vmem:[%s1 + $0x34] sm:$0xf]
    %v175 = vld [vmem:[%s1 + $0x38] sm:$0xf]
    %v176 = vld [vmem:[%s1 + $0x3c] sm:$0xf]
    %v305 = vunpack.c.l.b16 %v33
    %v306 = vunpack.c.l.b16 %v34
    %v307 = vunpack.c.l.b16 %v35
    %v308 = vunpack.c.l.b16 %v36
    %v309 = vunpack.c.l.b16 %v37
    %v310 = vunpack.c.l.b16 %v38
    %v311 = vunpack.c.l.b16 %v39
    %v312 = vunpack.c.l.b16 %v40
    %v313 = vunpack.c.l.b16 %v41
    %v314 = vunpack.c.l.b16 %v42
    %v315 = vunpack.c.l.b16 %v43
    %v316 = vunpack.c.l.b16 %v44
    %v317 = vunpack.c.l.b16 %v45
    %v318 = vunpack.c.l.b16 %v46
    %v319 = vunpack.c.l.b16 %v47
    %v320 = vunpack.c.l.b16 %v48
    %v321 = vunpack.c.l.b16 %v49
    %v322 = vunpack.c.l.b16 %v50
    %v323 = vunpack.c.l.b16 %v51
    %v324 = vunpack.c.l.b16 %v52
    %v325 = vunpack.c.l.b16 %v53
    %v326 = vunpack.c.l.b16 %v54
    %v327 = vunpack.c.l.b16 %v55
    %v328 = vunpack.c.l.b16 %v56
    %v329 = vunpack.c.l.b16 %v57
    %v330 = vunpack.c.l.b16 %v58
    %v331 = vunpack.c.l.b16 %v59
    %v332 = vunpack.c.l.b16 %v60
    %v333 = vunpack.c.l.b16 %v61
    %v334 = vunpack.c.l.b16 %v62
    %v335 = vunpack.c.l.b16 %v63
    %v336 = vunpack.c.l.b16 %v64
    %v337 = vunpack.c.l.b16 %v65
    %v338 = vunpack.c.l.b16 %v66
    %v339 = vunpack.c.l.b16 %v67
    %v340 = vunpack.c.l.b16 %v68
    %v341 = vunpack.c.l.b16 %v69
    %v342 = vunpack.c.l.b16 %v70
    %v343 = vunpack.c.l.b16 %v71
    %v344 = vunpack.c.l.b16 %v72
    %v345 = vunpack.c.l.b16 %v73
    %v346 = vunpack.c.l.b16 %v74
    %v347 = vunpack.c.l.b16 %v75
    %v348 = vunpack.c.l.b16 %v76
    %v349 = vunpack.c.l.b16 %v77
    %v350 = vunpack.c.l.b16 %v78
    %v351 = vunpack.c.l.b16 %v79
    %v352 = vunpack.c.l.b16 %v80
    %v353 = vunpack.c.l.b16 %v81
    %v354 = vunpack.c.l.b16 %v82
    %v355 = vunpack.c.l.b16 %v83
    %v356 = vunpack.c.l.b16 %v84
    %v357 = vunpack.c.l.b16 %v85
    %v358 = vunpack.c.l.b16 %v86
    %v359 = vunpack.c.l.b16 %v87
    %v360 = vunpack.c.l.b16 %v88
    %v361 = vunpack.c.l.b16 %v89
    %v362 = vunpack.c.l.b16 %v90
    %v363 = vunpack.c.l.b16 %v91
    %v364 = vunpack.c.l.b16 %v92
    %v365 = vunpack.c.l.b16 %v93
    %v366 = vunpack.c.l.b16 %v94
    %v367 = vunpack.c.l.b16 %v95
    %v368 = vunpack.c.l.b16 %v96
    %v369 = vunpack.c.l.b16 %v97
    %v370 = vunpack.c.l.b16 %v98
    %v371 = vunpack.c.l.b16 %v99
    %v372 = vunpack.c.l.b16 %v100
    %v373 = vunpack.c.l.b16 %v101
    %v374 = vunpack.c.l.b16 %v102
    %v375 = vunpack.c.l.b16 %v103
    %v376 = vunpack.c.l.b16 %v104
    %v377 = vunpack.c.l.b16 %v105
    %v378 = vunpack.c.l.b16 %v106
    %v379 = vunpack.c.l.b16 %v107
    %v380 = vunpack.c.l.b16 %v108
    %v381 = vunpack.c.l.b16 %v109
    %v382 = vunpack.c.l.b16 %v110
    %v383 = vunpack.c.l.b16 %v111
    %v384 = vunpack.c.l.b16 %v112
    %v385 = vunpack.c.l.b16 %v113
    %v386 = vunpack.c.l.b16 %v114
    %v387 = vunpack.c.l.b16 %v115
    %v388 = vunpack.c.l.b16 %v116
    %v389 = vunpack.c.l.b16 %v117
    %v390 = vunpack.c.l.b16 %v118
    %v391 = vunpack.c.l.b16 %v119
    %v392 = vunpack.c.l.b16 %v120
    %v393 = vunpack.c.l.b16 %v121
    %v394 = vunpack.c.l.b16 %v122
    %v395 = vunpack.c.l.b16 %v123
    %v396 = vunpack.c.l.b16 %v124
    %v397 = vunpack.c.l.b16 %v125
    %v398 = vunpack.c.l.b16 %v126
    %v399 = vunpack.c.l.b16 %v127
    %v400 = vunpack.c.l.b16 %v128
    %v401 = vunpack.c.l.b16 %v129
    %v402 = vunpack.c.l.b16 %v130
    %v403 = vunpack.c.l.b16 %v131
    %v404 = vunpack.c.l.b16 %v132
    %v405 = vunpack.c.l.b16 %v133
    %v406 = vunpack.c.l.b16 %v134
    %v407 = vunpack.c.l.b16 %v135
    %v408 = vunpack.c.l.b16 %v136
    %v409 = vunpack.c.l.b16 %v137
    %v410 = vunpack.c.l.b16 %v138
    %v411 = vunpack.c.l.b16 %v139
    %v412 = vunpack.c.l.b16 %v140
    %v413 = vunpack.c.l.b16 %v141
    %v414 = vunpack.c.l.b16 %v142
    %v415 = vunpack.c.l.b16 %v143
    %v416 = vunpack.c.l.b16 %v144
    %v417 = vunpack.c.l.b16 %v145
    %v418 = vunpack.c.l.b16 %v146
    %v419 = vunpack.c.l.b16 %v147
    %v420 = vunpack.c.l.b16 %v148
    %v421 = vunpack.c.l.b16 %v149
    %v422 = vunpack.c.l.b16 %v150
    %v423 = vunpack.c.l.b16 %v151
    %v424 = vunpack.c.l.b16 %v152
    %v425 = vunpack.c.l.b16 %v153
    %v426 = vunpack.c.l.b16 %v154
    %v427 = vunpack.c.l.b16 %v155
    %v428 = vunpack.c.l.b16 %v156
    %v429 = vunpack.c.l.b16 %v157
    %v430 = vunpack.c.l.b16 %v158
    %v431 = vunpack.c.l.b16 %v159
    %v432 = vunpack.c.l.b16 %v160
    %v433 = vpack.c.b16 %v306, %v305
    %v434 = vpack.c.b16 %v308, %v307
    %v435 = vpack.c.b16 %v310, %v309
    %v436 = vpack.c.b16 %v312, %v311
    %v437 = vpack.c.b16 %v314, %v313
    %v438 = vpack.c.b16 %v316, %v315
    %v439 = vpack.c.b16 %v318, %v317
    %v440 = vpack.c.b16 %v320, %v319
    %v441 = vpack.c.b16 %v322, %v321
    %v442 = vpack.c.b16 %v324, %v323
    %v443 = vpack.c.b16 %v326, %v325
    %v444 = vpack.c.b16 %v328, %v327
    %v445 = vpack.c.b16 %v330, %v329
    %v446 = vpack.c.b16 %v332, %v331
    %v447 = vpack.c.b16 %v334, %v333
    %v448 = vpack.c.b16 %v336, %v335
    %v449 = vpack.c.b16 %v338, %v337
    %v450 = vpack.c.b16 %v340, %v339
    %v451 = vpack.c.b16 %v342, %v341
    %v452 = vpack.c.b16 %v344, %v343
    %v453 = vpack.c.b16 %v346, %v345
    %v454 = vpack.c.b16 %v348, %v347
    %v455 = vpack.c.b16 %v350, %v349
    %v456 = vpack.c.b16 %v352, %v351
    %v457 = vpack.c.b16 %v354, %v353
    %v458 = vpack.c.b16 %v356, %v355
    %v459 = vpack.c.b16 %v358, %v357
    %v460 = vpack.c.b16 %v360, %v359
    %v461 = vpack.c.b16 %v362, %v361
    %v462 = vpack.c.b16 %v364, %v363
    %v463 = vpack.c.b16 %v366, %v365
    %v464 = vpack.c.b16 %v368, %v367
    %v465 = vpack.c.b16 %v370, %v369
    %v466 = vpack.c.b16 %v372, %v371
    %v467 = vpack.c.b16 %v374, %v373
    %v468 = vpack.c.b16 %v376, %v375
    %v469 = vpack.c.b16 %v378, %v377
    %v470 = vpack.c.b16 %v380, %v379
    %v471 = vpack.c.b16 %v382, %v381
    %v472 = vpack.c.b16 %v384, %v383
    %v473 = vpack.c.b16 %v386, %v385
    %v474 = vpack.c.b16 %v388, %v387
    %v475 = vpack.c.b16 %v390, %v389
    %v476 = vpack.c.b16 %v392, %v391
    %v477 = vpack.c.b16 %v394, %v393
    %v478 = vpack.c.b16 %v396, %v395
    %v479 = vpack.c.b16 %v398, %v397
    %v480 = vpack.c.b16 %v400, %v399
    %v481 = vpack.c.b16 %v402, %v401
    %v482 = vpack.c.b16 %v404, %v403
    %v483 = vpack.c.b16 %v406, %v405
    %v484 = vpack.c.b16 %v408, %v407
    %v485 = vpack.c.b16 %v410, %v409
    %v486 = vpack.c.b16 %v412, %v411
    %v487 = vpack.c.b16 %v414, %v413
    %v488 = vpack.c.b16 %v416, %v415
    %v489 = vpack.c.b16 %v418, %v417
    %v490 = vpack.c.b16 %v420, %v419
    %v491 = vpack.c.b16 %v422, %v421
    %v492 = vpack.c.b16 %v424, %v423
    %v493 = vpack.c.b16 %v426, %v425
    %v494 = vpack.c.b16 %v428, %v427
    %v495 = vpack.c.b16 %v430, %v429
    %v496 = vpack.c.b16 %v432, %v431
    %v577 = vunpack.c.l.b16 %v161
    %v578 = vunpack.c.l.b16 %v162
    %v579 = vunpack.c.l.b16 %v163
    %v580 = vunpack.c.l.b16 %v164
    %v581 = vunpack.c.l.b16 %v165
    %v582 = vunpack.c.l.b16 %v166
    %v583 = vunpack.c.l.b16 %v167
    %v584 = vunpack.c.l.b16 %v168
    %v585 = vunpack.c.l.b16 %v169
    %v586 = vunpack.c.l.b16 %v170
    %v587 = vunpack.c.l.b16 %v171
    %v588 = vunpack.c.l.b16 %v172
    %v589 = vunpack.c.l.b16 %v173
    %v590 = vunpack.c.l.b16 %v174
    %v591 = vunpack.c.l.b16 %v175
    %v592 = vunpack.c.l.b16 %v176
    %v593 = vpack.c.b16 %v578, %v577
    %v594 = vpack.c.b16 %v580, %v579
    %v595 = vpack.c.b16 %v582, %v581
    %v596 = vpack.c.b16 %v584, %v583
    %v597 = vpack.c.b16 %v586, %v585
    %v598 = vpack.c.b16 %v588, %v587
    %v599 = vpack.c.b16 %v590, %v589
    %v600 = vpack.c.b16 %v592, %v591
    %609 = vmatprep.subr.bf16.mxu0 0
    %610 = vmatpush1.bf16.msra.mxu0 %v593
    %611 = vmatprep.subr.bf16.mxu0 0
    %612 = vmatpush1.bf16.msra.mxu0 %v594
    %613 = vmatprep.subr.bf16.mxu0 0
    %614 = vmatpush1.bf16.msra.mxu0 %v595
    %615 = vmatprep.subr.bf16.mxu0 0
    %616 = vmatpush1.bf16.msra.mxu0 %v596
    %617 = vmatprep.subr.bf16.mxu0 0
    %618 = vmatpush1.bf16.msra.mxu0 %v597
    %619 = vmatprep.subr.bf16.mxu0 0
    %620 = vmatpush1.bf16.msra.mxu0 %v598
    %621 = vmatprep.subr.bf16.mxu0 0
    %622 = vmatpush1.bf16.msra.mxu0 %v599
    %623 = vmatprep.subr.bf16.mxu0 0
    %624 = vmatpush1.bf16.msra.mxu0 %v600
    %625 = vmatprep.subr.bf16.mxu0 0
    %626 = vmatpush1.bf16.msra.mxu0 0
    %627 = vmatprep.subr.bf16.mxu0 0
    %628 = vmatpush1.bf16.msra.mxu0 0
    %629 = vmatprep.subr.bf16.mxu0 0
    %630 = vmatpush1.bf16.msra.mxu0 0
    %631 = vmatprep.subr.bf16.mxu0 0
    %632 = vmatpush1.bf16.msra.mxu0 0
    %633 = vmatprep.subr.bf16.mxu0 0
    %634 = vmatpush1.bf16.msra.mxu0 0
    %635 = vmatprep.subr.bf16.mxu0 0
    %636 = vmatpush1.bf16.msra.mxu0 0
    %637 = vmatprep.subr.bf16.mxu0 0
    %638 = vmatpush1.bf16.msra.mxu0 0
    %639 = vmatprep.subr.bf16.mxu0 0
    %640 = vmatpush1.bf16.msra.mxu0 0
    %641 = vmatprep.mubr.bf16.mxu0 0
    %642 = vmatmul.mubr.bf16.gmra.mrb[0].mxu0 %v433
    %v643 = vpop.f32.mrb[0].mxu0
    %v644 = vadd.f32 0.0, %v643
    %v645 = vpop.f32.mrb[0].mxu0
    %v646 = vpop.f32.mrb[0].mxu0
    %v647 = vadd.f32 0.0, %v646
    %v648 = vpop.f32.mrb[0].mxu0
    %649 = vmatprep.mubr.bf16.mxu0 0
    %650 = vmatmul.mubr.bf16.gmra.mrb[0].mxu0 %v434
    %v651 = vpop.f32.mrb[0].mxu0
    %v652 = vadd.f32 0.0, %v651
    %v653 = vpop.f32.mrb[0].mxu0
    %v654 = vpop.f32.mrb[0].mxu0
    %v655 = vadd.f32 0.0, %v654
    %v656 = vpop.f32.mrb[0].mxu0
    %657 = vmatprep.mubr.bf16.mxu0 0
    %658 = vmatmul.mubr.bf16.gmra.mrb[0].mxu0 %v435
    %v659 = vpop.f32.mrb[0].mxu0
    %v660 = vadd.f32 0.0, %v659
    %v661 = vpop.f32.mrb[0].mxu0
    %v662 = vpop.f32.mrb[0].mxu0
    %v663 = vadd.f32 0.0, %v662
    %v664 = vpop.f32.mrb[0].mxu0
    %665 = vmatprep.mubr.bf16.mxu0 0
    %666 = vmatmul.mubr.bf16.gmra.mrb[0].mxu0 %v436
    %v667 = vpop.f32.mrb[0].mxu0
    %v668 = vadd.f32 0.0, %v667
    %v669 = vpop.f32.mrb[0].mxu0
    %v670 = vpop.f32.mrb[0].mxu0
    %v671 = vadd.f32 0.0, %v670
    %v672 = vpop.f32.mrb[0].mxu0
    %673 = vmatprep.mubr.bf16.mxu0 0
    %674 = vmatmul.mubr.bf16.gmra.mrb[0].mxu0 %v437
    %v675 = vpop.f32.mrb[0].mxu0
    %v676 = vadd.f32 0.0, %v675
    %v677 = vpop.f32.mrb[0].mxu0
    %v678 = vpop.f32.mrb[0].mxu0
    %v679 = vadd.f32 0.0, %v678
    %v680 = vpop.f32.mrb[0].mxu0
    %681 = vmatprep.mubr.bf16.mxu0 0
    %682 = vmatmul.mubr.bf16.gmra.mrb[0].mxu0 %v438
    %v683 = vpop.f32.mrb[0].mxu0
    %v684 = vadd.f32 0.0, %v683
    %v685 = vpop.f32.mrb[0].mxu0
    %v686 = vpop.f32.mrb[0].mxu0
    %v687 = vadd.f32 0.0, %v686
    %v688 = vpop.f32.mrb[0].mxu0
    %689 = vmatprep.mubr.bf16.mxu0 0
    %690 = vmatmul.mubr.bf16.gmra.mrb[0].mxu0 %v439
    %v691 = vpop.f32.mrb[0].mxu0
    %v692 = vadd.f32 0.0, %v691
    %v693 = vpop.f32.mrb[0].mxu0
    %v694 = vpop.f32.mrb[0].mxu0
    %v695 = vadd.f32 0.0, %v694
    %v696 = vpop.f32.mrb[0].mxu0
    %697 = vmatprep.mubr.bf16.mxu0 0
    %698 = vmatmul.mubr.bf16.gmra.mrb[0].mxu0 %v440
    %v699 = vpop.f32.mrb[0].mxu0
    %v700 = vadd.f32 0.0, %v699
    %v701 = vpop.f32.mrb[0].mxu0
    %v702 = vpop.f32.mrb[0].mxu0
    %v703 = vadd.f32 0.0, %v702
    %v704 = vpop.f32.mrb[0].mxu0
    %705 = vmatprep.mubr.bf16.mxu0 0
    %706 = vmatmul.mubr.bf16.gmra.mrb[0].mxu0 %v441
    %v707 = vpop.f32.mrb[0].mxu0
    %v708 = vadd.f32 0.0, %v707
    %v709 = vpop.f32.mrb[0].mxu0
    %v710 = vpop.f32.mrb[0].mxu0
    %v711 = vadd.f32 0.0, %v710
    %v712 = vpop.f32.mrb[0].mxu0
    %713 = vmatprep.mubr.bf16.mxu0 0
    %714 = vmatmul.mubr.bf16.gmra.mrb[0].mxu0 %v442
    %v715 = vpop.f32.mrb[0].mxu0
    %v716 = vadd.f32 0.0, %v715
    %v717 = vpop.f32.mrb[0].mxu0
    %v718 = vpop.f32.mrb[0].mxu0
    %v719 = vadd.f32 0.0, %v718
    %v720 = vpop.f32.mrb[0].mxu0
    %721 = vmatprep.mubr.bf16.mxu0 0
    %722 = vmatmul.mubr.bf16.gmra.mrb[0].mxu0 %v443
    %v723 = vpop.f32.mrb[0].mxu0
    %v724 = vadd.f32 0.0, %v723
    %v725 = vpop.f32.mrb[0].mxu0
    %v726 = vpop.f32.mrb[0].mxu0
    %v727 = vadd.f32 0.0, %v726
    %v728 = vpop.f32.mrb[0].mxu0
    %729 = vmatprep.mubr.bf16.mxu0 0
    %730 = vmatmul.mubr.bf16.gmra.mrb[0].mxu0 %v444
    %v731 = vpop.f32.mrb[0].mxu0
    %v732 = vadd.f32 0.0, %v731
    %v733 = vpop.f32.mrb[0].mxu0
    %v734 = vpop.f32.mrb[0].mxu0
    %v735 = vadd.f32 0.0, %v734
    %v736 = vpop.f32.mrb[0].mxu0
    %737 = vmatprep.mubr.bf16.mxu0 0
    %738 = vmatmul.mubr.bf16.gmra.mrb[0].mxu0 %v445
    %v739 = vpop.f32.mrb[0].mxu0
    %v740 = vadd.f32 0.0, %v739
    %v741 = vpop.f32.mrb[0].mxu0
    %v742 = vpop.f32.mrb[0].mxu0
    %v743 = vadd.f32 0.0, %v742
    %v744 = vpop.f32.mrb[0].mxu0
    %745 = vmatprep.mubr.bf16.mxu0 0
    %746 = vmatmul.mubr.bf16.gmra.mrb[0].mxu0 %v446
    %v747 = vpop.f32.mrb[0].mxu0
    %v748 = vadd.f32 0.0, %v747
    %v749 = vpop.f32.mrb[0].mxu0
    %v750 = vpop.f32.mrb[0].mxu0
    %v751 = vadd.f32 0.0, %v750
    %v752 = vpop.f32.mrb[0].mxu0
    %753 = vmatprep.mubr.bf16.mxu0 0
    %754 = vmatmul.mubr.bf16.gmra.mrb[0].mxu0 %v447
    %v755 = vpop.f32.mrb[0].mxu0
    %v756 = vadd.f32 0.0, %v755
    %v757 = vpop.f32.mrb[0].mxu0
    %v758 = vpop.f32.mrb[0].mxu0
    %v759 = vadd.f32 0.0, %v758
    %v760 = vpop.f32.mrb[0].mxu0
    %761 = vmatprep.mubr.bf16.mxu0 0
    %762 = vmatmul.mubr.bf16.gmra.mrb[0].mxu0 %v448
    %v763 = vpop.f32.mrb[0].mxu0
    %v764 = vadd.f32 0.0, %v763
    %v765 = vpop.f32.mrb[0].mxu0
    %v766 = vpop.f32.mrb[0].mxu0
    %v767 = vadd.f32 0.0, %v766
    %v768 = vpop.f32.mrb[0].mxu0
    %769 = vmatprep.mubr.bf16.mxu0 0
    %770 = vmatmul.mubr.bf16.gmra.mrb[0].mxu0 %v449
    %v771 = vpop.f32.mrb[0].mxu0
    %v772 = vadd.f32 0.0, %v771
    %v773 = vpop.f32.mrb[0].mxu0
    %v774 = vpop.f32.mrb[0].mxu0
    %v775 = vadd.f32 0.0, %v774
    %v776 = vpop.f32.mrb[0].mxu0
    %777 = vmatprep.mubr.bf16.mxu0 0
    %778 = vmatmul.mubr.bf16.gmra.mrb[0].mxu0 %v450
    %v779 = vpop.f32.mrb[0].mxu0
    %v780 = vadd.f32 0.0, %v779
    %v781 = vpop.f32.mrb[0].mxu0
    %v782 = vpop.f32.mrb[0].mxu0
    %v783 = vadd.f32 0.0, %v782
    %v784 = vpop.f32.mrb[0].mxu0
    %785 = vmatprep.mubr.bf16.mxu0 0
    %786 = vmatmul.mubr.bf16.gmra.mrb[0].mxu0 %v451
    %v787 = vpop.f32.mrb[0].mxu0
    %v788 = vadd.f32 0.0, %v787
    %v789 = vpop.f32.mrb[0].mxu0
    %v790 = vpop.f32.mrb[0].mxu0
    %v791 = vadd.f32 0.0, %v790
    %v792 = vpop.f32.mrb[0].mxu0
    %793 = vmatprep.mubr.bf16.mxu0 0
    %794 = vmatmul.mubr.bf16.gmra.mrb[0].mxu0 %v452
    %v795 = vpop.f32.mrb[0].mxu0
    %v796 = vadd.f32 0.0, %v795
    %v797 = vpop.f32.mrb[0].mxu0
    %v798 = vpop.f32.mrb[0].mxu0
    %v799 = vadd.f32 0.0, %v798
    %v800 = vpop.f32.mrb[0].mxu0
    %801 = vmatprep.mubr.bf16.mxu0 0
    %802 = vmatmul.mubr.bf16.gmra.mrb[0].mxu0 %v453
    %v803 = vpop.f32.mrb[0].mxu0
    %v804 = vadd.f32 0.0, %v803
    %v805 = vpop.f32.mrb[0].mxu0
    %v806 = vpop.f32.mrb[0].mxu0
    %v807 = vadd.f32 0.0, %v806
    %v808 = vpop.f32.mrb[0].mxu0
    %809 = vmatprep.mubr.bf16.mxu0 0
    %810 = vmatmul.mubr.bf16.gmra.mrb[0].mxu0 %v454
    %v811 = vpop.f32.mrb[0].mxu0
    %v812 = vadd.f32 0.0, %v811
    %v813 = vpop.f32.mrb[0].mxu0
    %v814 = vpop.f32.mrb[0].mxu0
    %v815 = vadd.f32 0.0, %v814
    %v816 = vpop.f32.mrb[0].mxu0
    %817 = vmatprep.mubr.bf16.mxu0 0
    %818 = vmatmul.mubr.bf16.gmra.mrb[0].mxu0 %v455
    %v819 = vpop.f32.mrb[0].mxu0
    %v820 = vadd.f32 0.0, %v819
    %v821 = vpop.f32.mrb[0].mxu0
    %v822 = vpop.f32.mrb[0].mxu0
    %v823 = vadd.f32 0.0, %v822
    %v824 = vpop.f32.mrb[0].mxu0
    %825 = vmatprep.mubr.bf16.mxu0 0
    %826 = vmatmul.mubr.bf16.gmra.mrb[0].mxu0 %v456
    %v827 = vpop.f32.mrb[0].mxu0
    %v828 = vadd.f32 0.0, %v827
    %v829 = vpop.f32.mrb[0].mxu0
    %v830 = vpop.f32.mrb[0].mxu0
    %v831 = vadd.f32 0.0, %v830
    %v832 = vpop.f32.mrb[0].mxu0
    %833 = vmatprep.mubr.bf16.mxu0 0
    %834 = vmatmul.mubr.bf16.gmra.mrb[0].mxu0 %v457
    %v835 = vpop.f32.mrb[0].mxu0
    %v836 = vadd.f32 0.0, %v835
    %v837 = vpop.f32.mrb[0].mxu0
    %v838 = vpop.f32.mrb[0].mxu0
    %v839 = vadd.f32 0.0, %v838
    %v840 = vpop.f32.mrb[0].mxu0
    %841 = vmatprep.mubr.bf16.mxu0 0
    %842 = vmatmul.mubr.bf16.gmra.mrb[0].mxu0 %v458
    %v843 = vpop.f32.mrb[0].mxu0
    %v844 = vadd.f32 0.0, %v843
    %v845 = vpop.f32.mrb[0].mxu0
    %v846 = vpop.f32.mrb[0].mxu0
    %v847 = vadd.f32 0.0, %v846
    %v848 = vpop.f32.mrb[0].mxu0
    %849 = vmatprep.mubr.bf16.mxu0 0
    %850 = vmatmul.mubr.bf16.gmra.mrb[0].mxu0 %v459
    %v851 = vpop.f32.mrb[0].mxu0
    %v852 = vadd.f32 0.0, %v851
    %v853 = vpop.f32.mrb[0].mxu0
    %v854 = vpop.f32.mrb[0].mxu0
    %v855 = vadd.f32 0.0, %v854
    %v856 = vpop.f32.mrb[0].mxu0
    %857 = vmatprep.mubr.bf16.mxu0 0
    %858 = vmatmul.mubr.bf16.gmra.mrb[0].mxu0 %v460
    %v859 = vpop.f32.mrb[0].mxu0
    %v860 = vadd.f32 0.0, %v859
    %v861 = vpop.f32.mrb[0].mxu0
    %v862 = vpop.f32.mrb[0].mxu0
    %v863 = vadd.f32 0.0, %v862
    %v864 = vpop.f32.mrb[0].mxu0
    %865 = vmatprep.mubr.bf16.mxu0 0
    %866 = vmatmul.mubr.bf16.gmra.mrb[0].mxu0 %v461
    %v867 = vpop.f32.mrb[0].mxu0
    %v868 = vadd.f32 0.0, %v867
    %v869 = vpop.f32.mrb[0].mxu0
    %v870 = vpop.f32.mrb[0].mxu0
    %v871 = vadd.f32 0.0, %v870
    %v872 = vpop.f32.mrb[0].mxu0
    %873 = vmatprep.mubr.bf16.mxu0 0
    %874 = vmatmul.mubr.bf16.gmra.mrb[0].mxu0 %v462
    %v875 = vpop.f32.mrb[0].mxu0
    %v876 = vadd.f32 0.0, %v875
    %v877 = vpop.f32.mrb[0].mxu0
    %v878 = vpop.f32.mrb[0].mxu0
    %v879 = vadd.f32 0.0, %v878
    %v880 = vpop.f32.mrb[0].mxu0
    %881 = vmatprep.mubr.bf16.mxu0 0
    %882 = vmatmul.mubr.bf16.gmra.mrb[0].mxu0 %v463
    %v883 = vpop.f32.mrb[0].mxu0
    %v884 = vadd.f32 0.0, %v883
    %v885 = vpop.f32.mrb[0].mxu0
    %v886 = vpop.f32.mrb[0].mxu0
    %v887 = vadd.f32 0.0, %v886
    %v888 = vpop.f32.mrb[0].mxu0
    %889 = vmatprep.mubr.bf16.mxu0 0
    %890 = vmatmul.mubr.bf16.gmra.mrb[0].mxu0 %v464
    %v891 = vpop.f32.mrb[0].mxu0
    %v892 = vadd.f32 0.0, %v891
    %v893 = vpop.f32.mrb[0].mxu0
    %v894 = vpop.f32.mrb[0].mxu0
    %v895 = vadd.f32 0.0, %v894
    %v896 = vpop.f32.mrb[0].mxu0
    %897 = vmatprep.mubr.bf16.mxu0 0
    %898 = vmatmul.mubr.bf16.gmra.mrb[0].mxu0 %v465
    %v899 = vpop.f32.mrb[0].mxu0
    %v900 = vadd.f32 0.0, %v899
    %v901 = vpop.f32.mrb[0].mxu0
    %v902 = vpop.f32.mrb[0].mxu0
    %v903 = vadd.f32 0.0, %v902
    %v904 = vpop.f32.mrb[0].mxu0
    %905 = vmatprep.mubr.bf16.mxu0 0
    %906 = vmatmul.mubr.bf16.gmra.mrb[0].mxu0 %v466
    %v907 = vpop.f32.mrb[0].mxu0
    %v908 = vadd.f32 0.0, %v907
    %v909 = vpop.f32.mrb[0].mxu0
    %v910 = vpop.f32.mrb[0].mxu0
    %v911 = vadd.f32 0.0, %v910
    %v912 = vpop.f32.mrb[0].mxu0
    %913 = vmatprep.mubr.bf16.mxu0 0
    %914 = vmatmul.mubr.bf16.gmra.mrb[0].mxu0 %v467
    %v915 = vpop.f32.mrb[0].mxu0
    %v916 = vadd.f32 0.0, %v915
    %v917 = vpop.f32.mrb[0].mxu0
    %v918 = vpop.f32.mrb[0].mxu0
    %v919 = vadd.f32 0.0, %v918
    %v920 = vpop.f32.mrb[0].mxu0
    %921 = vmatprep.mubr.bf16.mxu0 0
    %922 = vmatmul.mubr.bf16.gmra.mrb[0].mxu0 %v468
    %v923 = vpop.f32.mrb[0].mxu0
    %v924 = vadd.f32 0.0, %v923
    %v925 = vpop.f32.mrb[0].mxu0
    %v926 = vpop.f32.mrb[0].mxu0
    %v927 = vadd.f32 0.0, %v926
    %v928 = vpop.f32.mrb[0].mxu0
    %929 = vmatprep.mubr.bf16.mxu0 0
    %930 = vmatmul.mubr.bf16.gmra.mrb[0].mxu0 %v469
    %v931 = vpop.f32.mrb[0].mxu0
    %v932 = vadd.f32 0.0, %v931
    %v933 = vpop.f32.mrb[0].mxu0
    %v934 = vpop.f32.mrb[0].mxu0
    %v935 = vadd.f32 0.0, %v934
    %v936 = vpop.f32.mrb[0].mxu0
    %937 = vmatprep.mubr.bf16.mxu0 0
    %938 = vmatmul.mubr.bf16.gmra.mrb[0].mxu0 %v470
    %v939 = vpop.f32.mrb[0].mxu0
    %v940 = vadd.f32 0.0, %v939
    %v941 = vpop.f32.mrb[0].mxu0
    %v942 = vpop.f32.mrb[0].mxu0
    %v943 = vadd.f32 0.0, %v942
    %v944 = vpop.f32.mrb[0].mxu0
    %945 = vmatprep.mubr.bf16.mxu0 0
    %946 = vmatmul.mubr.bf16.gmra.mrb[0].mxu0 %v471
    %v947 = vpop.f32.mrb[0].mxu0
    %v948 = vadd.f32 0.0, %v947
    %v949 = vpop.f32.mrb[0].mxu0
    %v950 = vpop.f32.mrb[0].mxu0
    %v951 = vadd.f32 0.0, %v950
    %v952 = vpop.f32.mrb[0].mxu0
    %953 = vmatprep.mubr.bf16.mxu0 0
    %954 = vmatmul.mubr.bf16.gmra.mrb[0].mxu0 %v472
    %v955 = vpop.f32.mrb[0].mxu0
    %v956 = vadd.f32 0.0, %v955
    %v957 = vpop.f32.mrb[0].mxu0
    %v958 = vpop.f32.mrb[0].mxu0
    %v959 = vadd.f32 0.0, %v958
    %v960 = vpop.f32.mrb[0].mxu0
    %961 = vmatprep.mubr.bf16.mxu0 0
    %962 = vmatmul.mubr.bf16.gmra.mrb[0].mxu0 %v473
    %v963 = vpop.f32.mrb[0].mxu0
    %v964 = vadd.f32 0.0, %v963
    %v965 = vpop.f32.mrb[0].mxu0
    %v966 = vpop.f32.mrb[0].mxu0
    %v967 = vadd.f32 0.0, %v966
    %v968 = vpop.f32.mrb[0].mxu0
    %969 = vmatprep.mubr.bf16.mxu0 0
    %970 = vmatmul.mubr.bf16.gmra.mrb[0].mxu0 %v474
    %v971 = vpop.f32.mrb[0].mxu0
    %v972 = vadd.f32 0.0, %v971
    %v973 = vpop.f32.mrb[0].mxu0
    %v974 = vpop.f32.mrb[0].mxu0
    %v975 = vadd.f32 0.0, %v974
    %v976 = vpop.f32.mrb[0].mxu0
    %977 = vmatprep.mubr.bf16.mxu0 0
    %978 = vmatmul.mubr.bf16.gmra.mrb[0].mxu0 %v475
    %v979 = vpop.f32.mrb[0].mxu0
    %v980 = vadd.f32 0.0, %v979
    %v981 = vpop.f32.mrb[0].mxu0
    %v982 = vpop.f32.mrb[0].mxu0
    %v983 = vadd.f32 0.0, %v982
    %v984 = vpop.f32.mrb[0].mxu0
    %985 = vmatprep.mubr.bf16.mxu0 0
    %986 = vmatmul.mubr.bf16.gmra.mrb[0].mxu0 %v476
    %v987 = vpop.f32.mrb[0].mxu0
    %v988 = vadd.f32 0.0, %v987
    %v989 = vpop.f32.mrb[0].mxu0
    %v990 = vpop.f32.mrb[0].mxu0
    %v991 = vadd.f32 0.0, %v990
    %v992 = vpop.f32.mrb[0].mxu0
    %993 = vmatprep.mubr.bf16.mxu0 0
    %994 = vmatmul.mubr.bf16.gmra.mrb[0].mxu0 %v477
    %v995 = vpop.f32.mrb[0].mxu0
    %v996 = vadd.f32 0.0, %v995
    %v997 = vpop.f32.mrb[0].mxu0
    %v998 = vpop.f32.mrb[0].mxu0
    %v999 = vadd.f32 0.0, %v998
    %v1000 = vpop.f32.mrb[0].mxu0
    %1001 = vmatprep.mubr.bf16.mxu0 0
    %1002 = vmatmul.mubr.bf16.gmra.mrb[0].mxu0 %v478
    %v1003 = vpop.f32.mrb[0].mxu0
    %v1004 = vadd.f32 0.0, %v1003
    %v1005 = vpop.f32.mrb[0].mxu0
    %v1006 = vpop.f32.mrb[0].mxu0
    %v1007 = vadd.f32 0.0, %v1006
    %v1008 = vpop.f32.mrb[0].mxu0
    %1009 = vmatprep.mubr.bf16.mxu0 0
    %1010 = vmatmul.mubr.bf16.gmra.mrb[0].mxu0 %v479
    %v1011 = vpop.f32.mrb[0].mxu0
    %v1012 = vadd.f32 0.0, %v1011
    %v1013 = vpop.f32.mrb[0].mxu0
    %v1014 = vpop.f32.mrb[0].mxu0
    %v1015 = vadd.f32 0.0, %v1014
    %v1016 = vpop.f32.mrb[0].mxu0
    %1017 = vmatprep.mubr.bf16.mxu0 0
    %1018 = vmatmul.mubr.bf16.gmra.mrb[0].mxu0 %v480
    %v1019 = vpop.f32.mrb[0].mxu0
    %v1020 = vadd.f32 0.0, %v1019
    %v1021 = vpop.f32.mrb[0].mxu0
    %v1022 = vpop.f32.mrb[0].mxu0
    %v1023 = vadd.f32 0.0, %v1022
    %v1024 = vpop.f32.mrb[0].mxu0
    %1025 = vmatprep.mubr.bf16.mxu0 0
    %1026 = vmatmul.mubr.bf16.gmra.mrb[0].mxu0 %v481
    %v1027 = vpop.f32.mrb[0].mxu0
    %v1028 = vadd.f32 0.0, %v1027
    %v1029 = vpop.f32.mrb[0].mxu0
    %v1030 = vpop.f32.mrb[0].mxu0
    %v1031 = vadd.f32 0.0, %v1030
    %v1032 = vpop.f32.mrb[0].mxu0
    %1033 = vmatprep.mubr.bf16.mxu0 0
    %1034 = vmatmul.mubr.bf16.gmra.mrb[0].mxu0 %v482
    %v1035 = vpop.f32.mrb[0].mxu0
    %v1036 = vadd.f32 0.0, %v1035
    %v1037 = vpop.f32.mrb[0].mxu0
    %v1038 = vpop.f32.mrb[0].mxu0
    %v1039 = vadd.f32 0.0, %v1038
    %v1040 = vpop.f32.mrb[0].mxu0
    %1041 = vmatprep.mubr.bf16.mxu0 0
    %1042 = vmatmul.mubr.bf16.gmra.mrb[0].mxu0 %v483
    %v1043 = vpop.f32.mrb[0].mxu0
    %v1044 = vadd.f32 0.0, %v1043
    %v1045 = vpop.f32.mrb[0].mxu0
    %v1046 = vpop.f32.mrb[0].mxu0
    %v1047 = vadd.f32 0.0, %v1046
    %v1048 = vpop.f32.mrb[0].mxu0
    %1049 = vmatprep.mubr.bf16.mxu0 0
    %1050 = vmatmul.mubr.bf16.gmra.mrb[0].mxu0 %v484
    %v1051 = vpop.f32.mrb[0].mxu0
    %v1052 = vadd.f32 0.0, %v1051
    %v1053 = vpop.f32.mrb[0].mxu0
    %v1054 = vpop.f32.mrb[0].mxu0
    %v1055 = vadd.f32 0.0, %v1054
    %v1056 = vpop.f32.mrb[0].mxu0
    %1057 = vmatprep.mubr.bf16.mxu0 0
    %1058 = vmatmul.mubr.bf16.gmra.mrb[0].mxu0 %v485
    %v1059 = vpop.f32.mrb[0].mxu0
    %v1060 = vadd.f32 0.0, %v1059
    %v1061 = vpop.f32.mrb[0].mxu0
    %v1062 = vpop.f32.mrb[0].mxu0
    %v1063 = vadd.f32 0.0, %v1062
    %v1064 = vpop.f32.mrb[0].mxu0
    %1065 = vmatprep.mubr.bf16.mxu0 0
    %1066 = vmatmul.mubr.bf16.gmra.mrb[0].mxu0 %v486
    %v1067 = vpop.f32.mrb[0].mxu0
    %v1068 = vadd.f32 0.0, %v1067
    %v1069 = vpop.f32.mrb[0].mxu0
    %v1070 = vpop.f32.mrb[0].mxu0
    %v1071 = vadd.f32 0.0, %v1070
    %v1072 = vpop.f32.mrb[0].mxu0
    %1073 = vmatprep.mubr.bf16.mxu0 0
    %1074 = vmatmul.mubr.bf16.gmra.mrb[0].mxu0 %v487
    %v1075 = vpop.f32.mrb[0].mxu0
    %v1076 = vadd.f32 0.0, %v1075
    %v1077 = vpop.f32.mrb[0].mxu0
    %v1078 = vpop.f32.mrb[0].mxu0
    %v1079 = vadd.f32 0.0, %v1078
    %v1080 = vpop.f32.mrb[0].mxu0
    %1081 = vmatprep.mubr.bf16.mxu0 0
    %1082 = vmatmul.mubr.bf16.gmra.mrb[0].mxu0 %v488
    %v1083 = vpop.f32.mrb[0].mxu0
    %v1084 = vadd.f32 0.0, %v1083
    %v1085 = vpop.f32.mrb[0].mxu0
    %v1086 = vpop.f32.mrb[0].mxu0
    %v1087 = vadd.f32 0.0, %v1086
    %v1088 = vpop.f32.mrb[0].mxu0
    %1089 = vmatprep.mubr.bf16.mxu0 0
    %1090 = vmatmul.mubr.bf16.gmra.mrb[0].mxu0 %v489
    %v1091 = vpop.f32.mrb[0].mxu0
    %v1092 = vadd.f32 0.0, %v1091
    %v1093 = vpop.f32.mrb[0].mxu0
    %v1094 = vpop.f32.mrb[0].mxu0
    %v1095 = vadd.f32 0.0, %v1094
    %v1096 = vpop.f32.mrb[0].mxu0
    %1097 = vmatprep.mubr.bf16.mxu0 0
    %1098 = vmatmul.mubr.bf16.gmra.mrb[0].mxu0 %v490
    %v1099 = vpop.f32.mrb[0].mxu0
    %v1100 = vadd.f32 0.0, %v1099
    %v1101 = vpop.f32.mrb[0].mxu0
    %v1102 = vpop.f32.mrb[0].mxu0
    %v1103 = vadd.f32 0.0, %v1102
    %v1104 = vpop.f32.mrb[0].mxu0
    %1105 = vmatprep.mubr.bf16.mxu0 0
    %1106 = vmatmul.mubr.bf16.gmra.mrb[0].mxu0 %v491
    %v1107 = vpop.f32.mrb[0].mxu0
    %v1108 = vadd.f32 0.0, %v1107
    %v1109 = vpop.f32.mrb[0].mxu0
    %v1110 = vpop.f32.mrb[0].mxu0
    %v1111 = vadd.f32 0.0, %v1110
    %v1112 = vpop.f32.mrb[0].mxu0
    %1113 = vmatprep.mubr.bf16.mxu0 0
    %1114 = vmatmul.mubr.bf16.gmra.mrb[0].mxu0 %v492
    %v1115 = vpop.f32.mrb[0].mxu0
    %v1116 = vadd.f32 0.0, %v1115
    %v1117 = vpop.f32.mrb[0].mxu0
    %v1118 = vpop.f32.mrb[0].mxu0
    %v1119 = vadd.f32 0.0, %v1118
    %v1120 = vpop.f32.mrb[0].mxu0
    %1121 = vmatprep.mubr.bf16.mxu0 0
    %1122 = vmatmul.mubr.bf16.gmra.mrb[0].mxu0 %v493
    %v1123 = vpop.f32.mrb[0].mxu0
    %v1124 = vadd.f32 0.0, %v1123
    %v1125 = vpop.f32.mrb[0].mxu0
    %v1126 = vpop.f32.mrb[0].mxu0
    %v1127 = vadd.f32 0.0, %v1126
    %v1128 = vpop.f32.mrb[0].mxu0
    %1129 = vmatprep.mubr.bf16.mxu0 0
    %1130 = vmatmul.mubr.bf16.gmra.mrb[0].mxu0 %v494
    %v1131 = vpop.f32.mrb[0].mxu0
    %v1132 = vadd.f32 0.0, %v1131
    %v1133 = vpop.f32.mrb[0].mxu0
    %v1134 = vpop.f32.mrb[0].mxu0
    %v1135 = vadd.f32 0.0, %v1134
    %v1136 = vpop.f32.mrb[0].mxu0
    %1137 = vmatprep.mubr.bf16.mxu0 0
    %1138 = vmatmul.mubr.bf16.gmra.mrb[0].mxu0 %v495
    %v1139 = vpop.f32.mrb[0].mxu0
    %v1140 = vadd.f32 0.0, %v1139
    %v1141 = vpop.f32.mrb[0].mxu0
    %v1142 = vpop.f32.mrb[0].mxu0
    %v1143 = vadd.f32 0.0, %v1142
    %v1144 = vpop.f32.mrb[0].mxu0
    %1145 = vmatprep.mubr.bf16.mxu0 0
    %1146 = vmatmul.mubr.bf16.gmra.mrb[0].mxu0 %v496
    %v1147 = vpop.f32.mrb[0].mxu0
    %v1148 = vadd.f32 0.0, %v1147
    %v1149 = vpop.f32.mrb[0].mxu0
    %v1150 = vpop.f32.mrb[0].mxu0
    %v1151 = vadd.f32 0.0, %v1150
    %v1152 = vpop.f32.mrb[0].mxu0
    %1153 = vdwg.mxu0
    %v1154 = vmax.f32 %v644, %v708
    %v1155 = vmax.f32 %v647, %v711
    %v1156 = vmax.f32 %v652, %v716
    %v1157 = vmax.f32 %v655, %v719
    %v1158 = vmax.f32 %v660, %v724
    %v1159 = vmax.f32 %v663, %v727
    %v1160 = vmax.f32 %v668, %v732
    %v1161 = vmax.f32 %v671, %v735
    %v1162 = vmax.f32 %v676, %v740
    %v1163 = vmax.f32 %v679, %v743
    %v1164 = vmax.f32 %v684, %v748
    %v1165 = vmax.f32 %v687, %v751
    %v1166 = vmax.f32 %v692, %v756
    %v1167 = vmax.f32 %v695, %v759
    %v1168 = vmax.f32 %v700, %v764
    %v1169 = vmax.f32 %v703, %v767
    %v1170 = vmax.f32 %v1154, %v772
    %v1171 = vmax.f32 %v1155, %v775
    %v1172 = vmax.f32 %v1156, %v780
    %v1173 = vmax.f32 %v1157, %v783
    %v1174 = vmax.f32 %v1158, %v788
    %v1175 = vmax.f32 %v1159, %v791
    %v1176 = vmax.f32 %v1160, %v796
    %v1177 = vmax.f32 %v1161, %v799
    %v1178 = vmax.f32 %v1162, %v804
    %v1179 = vmax.f32 %v1163, %v807
    %v1180 = vmax.f32 %v1164, %v812
    %v1181 = vmax.f32 %v1165, %v815
    %v1182 = vmax.f32 %v1166, %v820
    %v1183 = vmax.f32 %v1167, %v823
    %v1184 = vmax.f32 %v1168, %v828
    %v1185 = vmax.f32 %v1169, %v831
    %v1186 = vmax.f32 %v1170, %v836
    %v1187 = vmax.f32 %v1171, %v839
    %v1188 = vmax.f32 %v1172, %v844
    %v1189 = vmax.f32 %v1173, %v847
    %v1190 = vmax.f32 %v1174, %v852
    %v1191 = vmax.f32 %v1175, %v855
    %v1192 = vmax.f32 %v1176, %v860
    %v1193 = vmax.f32 %v1177, %v863
    %v1194 = vmax.f32 %v1178, %v868
    %v1195 = vmax.f32 %v1179, %v871
    %v1196 = vmax.f32 %v1180, %v876
    %v1197 = vmax.f32 %v1181, %v879
    %v1198 = vmax.f32 %v1182, %v884
    %v1199 = vmax.f32 %v1183, %v887
    %v1200 = vmax.f32 %v1184, %v892
    %v1201 = vmax.f32 %v1185, %v895
    %v1202 = vmax.f32 %v1186, %v900
    %v1203 = vmax.f32 %v1187, %v903
    %v1204 = vmax.f32 %v1188, %v908
    %v1205 = vmax.f32 %v1189, %v911
    %v1206 = vmax.f32 %v1190, %v916
    %v1207 = vmax.f32 %v1191, %v919
    %v1208 = vmax.f32 %v1192, %v924
    %v1209 = vmax.f32 %v1193, %v927
    %v1210 = vmax.f32 %v1194, %v932
    %v1211 = vmax.f32 %v1195, %v935
    %v1212 = vmax.f32 %v1196, %v940
    %v1213 = vmax.f32 %v1197, %v943
    %v1214 = vmax.f32 %v1198, %v948
    %v1215 = vmax.f32 %v1199, %v951
    %v1216 = vmax.f32 %v1200, %v956
    %v1217 = vmax.f32 %v1201, %v959
    %v1218 = vmax.f32 %v1202, %v964
    %v1219 = vmax.f32 %v1203, %v967
    %v1220 = vmax.f32 %v1204, %v972
    %v1221 = vmax.f32 %v1205, %v975
    %v1222 = vmax.f32 %v1206, %v980
    %v1223 = vmax.f32 %v1207, %v983
    %v1224 = vmax.f32 %v1208, %v988
    %v1225 = vmax.f32 %v1209, %v991
    %v1226 = vmax.f32 %v1210, %v996
    %v1227 = vmax.f32 %v1211, %v999
    %v1228 = vmax.f32 %v1212, %v1004
    %v1229 = vmax.f32 %v1213, %v1007
    %v1230 = vmax.f32 %v1214, %v1012
    %v1231 = vmax.f32 %v1215, %v1015
    %v1232 = vmax.f32 %v1216, %v1020
    %v1233 = vmax.f32 %v1217, %v1023
    %v1234 = vmax.f32 %v1218, %v1028
    %v1235 = vmax.f32 %v1219, %v1031
    %v1236 = vmax.f32 %v1220, %v1036
    %v1237 = vmax.f32 %v1221, %v1039
    %v1238 = vmax.f32 %v1222, %v1044
    %v1239 = vmax.f32 %v1223, %v1047
    %v1240 = vmax.f32 %v1224, %v1052
    %v1241 = vmax.f32 %v1225, %v1055
    %v1242 = vmax.f32 %v1226, %v1060
    %v1243 = vmax.f32 %v1227, %v1063
    %v1244 = vmax.f32 %v1228, %v1068
    %v1245 = vmax.f32 %v1229, %v1071
    %v1246 = vmax.f32 %v1230, %v1076
    %v1247 = vmax.f32 %v1231, %v1079
    %v1248 = vmax.f32 %v1232, %v1084
    %v1249 = vmax.f32 %v1233, %v1087
    %v1250 = vmax.f32 %v1234, %v1092
    %v1251 = vmax.f32 %v1235, %v1095
    %v1252 = vmax.f32 %v1236, %v1100
    %v1253 = vmax.f32 %v1237, %v1103
    %v1254 = vmax.f32 %v1238, %v1108
    %v1255 = vmax.f32 %v1239, %v1111
    %v1256 = vmax.f32 %v1240, %v1116
    %v1257 = vmax.f32 %v1241, %v1119
    %v1258 = vmax.f32 %v1242, %v1124
    %v1259 = vmax.f32 %v1243, %v1127
    %v1260 = vmax.f32 %v1244, %v1132
    %v1261 = vmax.f32 %v1245, %v1135
    %v1262 = vmax.f32 %v1246, %v1140
    %v1263 = vmax.f32 %v1247, %v1143
    %v1264 = vmax.f32 %v1248, %v1148
    %v1265 = vmax.f32 %v1249, %v1151
    %v1266 = vld [vmem:[%s2] sm:$0x1]
    %v1268 = vlaneseq
    %v1269 = vshrl.u32 %v1268, 7
    %v1270 = vsub.s32 0, %v1269
    %v1271 = vrot.slane %v1266, %v1270
    %v1273 = vadd.f32 %v1250, %v1271
    %v1274 = vadd.f32 %v1251, %v1271
    %v1275 = vadd.f32 %v1252, %v1271
    %v1276 = vadd.f32 %v1253, %v1271
    %v1277 = vadd.f32 %v1254, %v1271
    %v1278 = vadd.f32 %v1255, %v1271
    %v1279 = vadd.f32 %v1256, %v1271
    %v1280 = vadd.f32 %v1257, %v1271
    %v1281 = vadd.f32 %v1258, %v1271
    %v1282 = vadd.f32 %v1259, %v1271
    %v1283 = vadd.f32 %v1260, %v1271
    %v1284 = vadd.f32 %v1261, %v1271
    %v1285 = vadd.f32 %v1262, %v1271
    %v1286 = vadd.f32 %v1263, %v1271
    %v1287 = vadd.f32 %v1264, %v1271
    %v1288 = vadd.f32 %v1265, %v1271
    %s1289 = sld [smem:[#allocation2]]
    %vm1290 = vcmp.ge.f32.partialorder %v1273, 0.0
    %vm1291 = vcmp.ge.f32.partialorder %v1274, 0.0
    %vm1292 = vcmp.ge.f32.partialorder %v1275, 0.0
    %vm1293 = vcmp.ge.f32.partialorder %v1276, 0.0
    %vm1294 = vcmp.ge.f32.partialorder %v1277, 0.0
    %vm1295 = vcmp.ge.f32.partialorder %v1278, 0.0
    %vm1296 = vcmp.ge.f32.partialorder %v1279, 0.0
    %vm1297 = vcmp.ge.f32.partialorder %v1280, 0.0
    %vm1298 = vcmp.ge.f32.partialorder %v1281, 0.0
    %vm1299 = vcmp.ge.f32.partialorder %v1282, 0.0
    %vm1300 = vcmp.ge.f32.partialorder %v1283, 0.0
    %vm1301 = vcmp.ge.f32.partialorder %v1284, 0.0
    %vm1302 = vcmp.ge.f32.partialorder %v1285, 0.0
    %vm1303 = vcmp.ge.f32.partialorder %v1286, 0.0
    %vm1304 = vcmp.ge.f32.partialorder %v1287, 0.0
    %vm1305 = vcmp.ge.f32.partialorder %v1288, 0.0
    %v1306 = vstv %s1289
    %v1307 = vmul.f32 %v1306, %v1273
    %v1308 = vmul.f32 %v1306, %v1274
    %v1309 = vmul.f32 %v1306, %v1275
    %v1310 = vmul.f32 %v1306, %v1276
    %v1311 = vmul.f32 %v1306, %v1277
    %v1312 = vmul.f32 %v1306, %v1278
    %v1313 = vmul.f32 %v1306, %v1279
    %v1314 = vmul.f32 %v1306, %v1280
    %v1315 = vmul.f32 %v1306, %v1281
    %v1316 = vmul.f32 %v1306, %v1282
    %v1317 = vmul.f32 %v1306, %v1283
    %v1318 = vmul.f32 %v1306, %v1284
    %v1319 = vmul.f32 %v1306, %v1285
    %v1320 = vmul.f32 %v1306, %v1286
    %v1321 = vmul.f32 %v1306, %v1287
    %v1322 = vmul.f32 %v1306, %v1288
    %v1323 = vsel %vm1290, %v1273, %v1307
    %v1324 = vsel %vm1291, %v1274, %v1308
    %v1325 = vsel %vm1292, %v1275, %v1309
    %v1326 = vsel %vm1293, %v1276, %v1310
    %v1327 = vsel %vm1294, %v1277, %v1311
    %v1328 = vsel %vm1295, %v1278, %v1312
    %v1329 = vsel %vm1296, %v1279, %v1313
    %v1330 = vsel %vm1297, %v1280, %v1314
    %v1331 = vsel %vm1298, %v1281, %v1315
    %v1332 = vsel %vm1299, %v1282, %v1316
    %v1333 = vsel %vm1300, %v1283, %v1317
    %v1334 = vsel %vm1301, %v1284, %v1318
    %v1335 = vsel %vm1302, %v1285, %v1319
    %v1336 = vsel %vm1303, %v1286, %v1320
    %v1337 = vsel %vm1304, %v1287, %v1321
    %v1338 = vsel %vm1305, %v1288, %v1322
    %vm1339 = vcmask 64512
    %1340 = vst.msk [vmem:[%s4] sm:$0xff] %vm1339, %v1323
    %1341 = vst.msk [vmem:[%s4 + $0x8] sm:$0xff] %vm1339, %v1324
    %1342 = vst.msk [vmem:[%s4 + $0x10] sm:$0xff] %vm1339, %v1325
    %1343 = vst.msk [vmem:[%s4 + $0x18] sm:$0xff] %vm1339, %v1326
    %1344 = vst.msk [vmem:[%s4 + $0x20] sm:$0xff] %vm1339, %v1327
    %1345 = vst.msk [vmem:[%s4 + $0x28] sm:$0xff] %vm1339, %v1328
    %1346 = vst.msk [vmem:[%s4 + $0x30] sm:$0xff] %vm1339, %v1329
    %1347 = vst.msk [vmem:[%s4 + $0x38] sm:$0xff] %vm1339, %v1330
    %1348 = vst.msk [vmem:[%s4 + $0x40] sm:$0xff] %vm1339, %v1331
    %1349 = vst.msk [vmem:[%s4 + $0x48] sm:$0xff] %vm1339, %v1332
    %1350 = vst.msk [vmem:[%s4 + $0x50] sm:$0xff] %vm1339, %v1333
    %1351 = vst.msk [vmem:[%s4 + $0x58] sm:$0xff] %vm1339, %v1334
    %1352 = vst.msk [vmem:[%s4 + $0x60] sm:$0xff] %vm1339, %v1335
    %1353 = vst.msk [vmem:[%s4 + $0x68] sm:$0xff] %vm1339, %v1336
    %1354 = vst.msk [vmem:[%s4 + $0x70] sm:$0xff] %vm1339, %v1337
    %1355 = vst.msk [vmem:[%s4 + $0x78] sm:$0xff] %vm1339, %v1338
    // Predicated region
    $region22: #{tpu_custom_call.1} parent=1 // pred_check
      _
    $region23: #{tpu_custom_call.1} parent=1 // pred_check_branch
      %1357 = sbr.rel (0) target = $region25
    $region24: #{tpu_custom_call.1} parent=1 // pred_region
      _
    $region25: #{tpu_custom_call.1} parent=1 // pred_fallthru
      _
    // Predicated region
    $region26: #{tpu_custom_call.1} parent=1 // pred_check
      _
    $region27: #{tpu_custom_call.1} parent=1 // pred_check_branch
      %1359 = sbr.rel (0) target = $region29
    $region28: #{tpu_custom_call.1} parent=1 // pred_region
      _
    $region29: #{tpu_custom_call.1} parent=1 // pred_fallthru
      _
    %1360 = vsyncpa [#allocation4], 1

</llo_original>
